<compile_context>
chip_gen: v7x
topology: tpu7x:2x2x1
jax: 0.10.0
libtpu: 0.0.40
codegen_flags: <defaults>
</compile_context>

<pallas_src>
import jax
import jax.numpy as jnp
from jax.experimental import pallas as pl
from jax.experimental.pallas import tpu as pltpu

INPUT_DIM = 115
DIMS = [INPUT_DIM, 64, 32, 16, 32, 64, INPUT_DIM]


def _round_up(x, m):
    return (x + m - 1) // m * m


def _autoencoder_kernel(x_ref,
                        w1, b1, w2, b2, w3, b3,     # encoder
                        w4, b4, w5, b5, w6, b6,     # decoder
                        out_ref):
    """Fused forward pass.  Matmuls run in the weights' storage dtype (bf16 recommended)
    with f32 accumulation; biases/ReLU/sigmoid are applied in f32."""
    f32 = jnp.float32
    mxu_dtype = w1.dtype          # dtype fed to the MXU (bf16 for the fast path)

    def dense_relu(h, w_ref, b_ref):
        # bf16 x bf16 -> f32 accumulate on the MXU; tiny (1, fo) bias promotes to f32.
        z = jnp.dot(h, w_ref[...], preferred_element_type=f32) + b_ref[...]
        return jnp.maximum(z, 0.0).astype(mxu_dtype)

    h = x_ref[...].astype(mxu_dtype)

    # Encoder: Linear -> ReLU (x3)
    h = dense_relu(h, w1, b1)
    h = dense_relu(h, w2, b2)
    h = dense_relu(h, w3, b3)

    # Decoder: Linear -> ReLU (x2), Linear -> Sigmoid
    h = dense_relu(h, w4, b4)
    h = dense_relu(h, w5, b5)
    z = jnp.dot(h, w6[...], preferred_element_type=f32) + b6[...]

    # sigmoid(z) = 1 / (1 + exp(-z)); clamp so exp never overflows to inf.
    z = jnp.clip(z, -30.0, 30.0)
    e = jnp.exp(-z)
    approx = out_ref.dtype != jnp.float32   # approx recip (~2^-12 rel err) only for low-precision out
    out_ref[...] = pl.reciprocal(1.0 + e, approx=approx).astype(out_ref.dtype)


def autoencoder_forward(x, params, *, batch_tile=2048):
    """x: (B, 115). params: list of (W, b) with W (in, out) and b (1, out).
    bf16 storage recommended (accumulation is f32 regardless). Returns (B, 115) in x.dtype."""
    B, D = x.shape
    assert D == INPUT_DIM
    io_dtype = x.dtype

    # ---- batch tiling: cap at batch_tile, but prefer grid >= 2 so both v7x TCs are used ----
    half = _round_up((B + 1) // 2, 8)
    tile = max(8, min(_round_up(batch_tile, 8), half))
    Bp = _round_up(B, tile)
    grid = (Bp // tile,)

    # Only pad the batch dim, and only when needed (no feature-dim pad / slice passes).
    x_in = x if Bp == B else jnp.zeros((Bp, D), io_dtype).at[:B].set(x)

    flat_params = []
    in_specs = [pl.BlockSpec((tile, D), lambda i: (i, 0))]
    for (w, b) in params:
        flat_params += [w, b]
        # Small constant operands: one full block each, fetched once, resident in VMEM.
        in_specs.append(pl.BlockSpec(w.shape, lambda i: (0, 0)))
        in_specs.append(pl.BlockSpec(b.shape, lambda i: (0, 0)))

    out_spec = pl.BlockSpec((tile, D), lambda i: (i, 0))

    out_p = pl.pallas_call(
        _autoencoder_kernel,
        out_shape=jax.ShapeDtypeStruct((Bp, D), io_dtype),
        grid_spec=pltpu.PrefetchScalarGridSpec(
            num_scalar_prefetch=0,
            grid=grid,
            in_specs=in_specs,
            out_specs=out_spec,
        ),
        compiler_params=pltpu.CompilerParams(
            dimension_semantics=("parallel",)),
    )(x_in, *flat_params)

    return out_p if Bp == B else out_p[:B]


def init_params(key):
    """Deterministic init mimicking PyTorch nn.Linear default U(-1/sqrt(fan_in), +)."""
    params = []
    for idx in range(len(DIMS) - 1):
        fan_in, fan_out = DIMS[idx], DIMS[idx + 1]
        key, kw, kb = jax.random.split(key, 3)
        bound = 1.0 / jnp.sqrt(fan_in)
        w = jax.random.uniform(kw, (fan_in, fan_out), jnp.float32, -bound, bound)
        b = jax.random.uniform(kb, (1, fan_out), jnp.float32, -bound, bound)
        params.append((w, b))
    return params


def reference_forward(x, params):
    """Pure-JAX f32 reference for correctness checking."""
    h = x
    n = len(params)
    for i, (w, b) in enumerate(params):
        h = h @ w + b
        h = jnp.maximum(h, 0.0) if i < n - 1 else jax.nn.sigmoid(h)
    return h


if __name__ == "__main__":
    key = jax.random.PRNGKey(0)
    key, kx = jax.random.split(key)

    B = 20  # deliberately not a multiple of 8 / of the tile, to exercise batch padding
    x = jax.random.normal(kx, (B, INPUT_DIM), jnp.float32)
    params = init_params(jax.random.PRNGKey(0))

    # bf16 HBM storage for activations + weights: halves DMA bytes on an HBM-bound kernel
    # and hits the native bf16 MXU path; accumulation inside the kernel stays f32.
    x_bf16 = x.astype(jnp.bfloat16)
    params_bf16 = [(w.astype(jnp.bfloat16), b.astype(jnp.bfloat16)) for (w, b) in params]

    out = autoencoder_forward(x_bf16, params_bf16, batch_tile=2048)
    out = jax.block_until_ready(out)
    assert out.shape == (B, INPUT_DIM)

    # f32 reference on the same bf16-quantised values; remaining differences are bf16
    # rounding of inter-layer activations, the approximate reciprocal and bf16 output
    # rounding -- all well within 2e-2 on a [0, 1] sigmoid output.
    ref = reference_forward(
        x_bf16.astype(jnp.float32),
        [(w.astype(jnp.float32), b.astype(jnp.float32)) for (w, b) in params_bf16])
    assert jnp.allclose(out.astype(jnp.float32), ref, atol=2e-2, rtol=2e-2), \
        "mismatch vs pure-JAX reference"

    print("KERNEL_OK")
</pallas_src>

<mosaic_0001>
module attributes {stable_mosaic.version = 11 : i64} {
  func.func @_autoencoder_kernel(%arg0: i32, %arg1: memref<16x115xbf16, #tpu.memory_space<vmem>>, %arg2: memref<115x64xbf16, #tpu.memory_space<vmem>>, %arg3: memref<1x64xbf16, #tpu.memory_space<vmem>>, %arg4: memref<64x32xbf16, #tpu.memory_space<vmem>>, %arg5: memref<1x32xbf16, #tpu.memory_space<vmem>>, %arg6: memref<32x16xbf16, #tpu.memory_space<vmem>>, %arg7: memref<1x16xbf16, #tpu.memory_space<vmem>>, %arg8: memref<16x32xbf16, #tpu.memory_space<vmem>>, %arg9: memref<1x32xbf16, #tpu.memory_space<vmem>>, %arg10: memref<32x64xbf16, #tpu.memory_space<vmem>>, %arg11: memref<1x64xbf16, #tpu.memory_space<vmem>>, %arg12: memref<64x115xbf16, #tpu.memory_space<vmem>>, %arg13: memref<1x115xbf16, #tpu.memory_space<vmem>>, %arg14: memref<16x115xbf16, #tpu.memory_space<vmem>>) attributes {dimension_semantics = [#tpu.dimension_semantics<parallel>], iteration_bounds = array<i64: 2>, scalar_prefetch = 0 : i64, scratch_operands = 0 : i64, tpu.core_type = #tpu.core_type<tc>, window_params = [{transform_indices = @transform_0, window_bounds = array<i64: 16, 115>}, {pipeline_mode = #tpu.pipeline_mode<synchronous>, transform_indices = @transform_1, window_bounds = array<i64: 115, 64>}, {pipeline_mode = #tpu.pipeline_mode<synchronous>, transform_indices = @transform_2, window_bounds = array<i64: 1, 64>}, {pipeline_mode = #tpu.pipeline_mode<synchronous>, transform_indices = @transform_3, window_bounds = array<i64: 64, 32>}, {pipeline_mode = #tpu.pipeline_mode<synchronous>, transform_indices = @transform_4, window_bounds = array<i64: 1, 32>}, {pipeline_mode = #tpu.pipeline_mode<synchronous>, transform_indices = @transform_5, window_bounds = array<i64: 32, 16>}, {pipeline_mode = #tpu.pipeline_mode<synchronous>, transform_indices = @transform_6, window_bounds = array<i64: 1, 16>}, {pipeline_mode = #tpu.pipeline_mode<synchronous>, transform_indices = @transform_7, window_bounds = array<i64: 16, 32>}, {pipeline_mode = #tpu.pipeline_mode<synchronous>, transform_indices = @transform_8, window_bounds = array<i64: 1, 32>}, {pipeline_mode = #tpu.pipeline_mode<synchronous>, transform_indices = @transform_9, window_bounds = array<i64: 32, 64>}, {pipeline_mode = #tpu.pipeline_mode<synchronous>, transform_indices = @transform_10, window_bounds = array<i64: 1, 64>}, {pipeline_mode = #tpu.pipeline_mode<synchronous>, transform_indices = @transform_11, window_bounds = array<i64: 64, 115>}, {pipeline_mode = #tpu.pipeline_mode<synchronous>, transform_indices = @transform_12, window_bounds = array<i64: 1, 115>}, {transform_indices = @transform_13, window_bounds = array<i64: 16, 115>}]} {
    %c0 = arith.constant 0 : index
    %c0_0 = arith.constant 0 : index
    %0 = vector.load %arg1[%c0, %c0_0] : memref<16x115xbf16, #tpu.memory_space<vmem>>, vector<16x115xbf16>
    %c0_1 = arith.constant 0 : index
    %c0_2 = arith.constant 0 : index
    %1 = vector.load %arg2[%c0_1, %c0_2] : memref<115x64xbf16, #tpu.memory_space<vmem>>, vector<115x64xbf16>
    %cst = arith.constant dense<0.000000e+00> : vector<16x64xf32>
    %2 = tpu.matmul %0, %1, %cst {dimension_numbers = #tpu.dot_dimension_numbers<[1], [0], [0], [1], [0, 0, 1, 1], [], []>} : vector<16x115xbf16>, vector<115x64xbf16>, vector<16x64xf32> -> vector<16x64xf32>
    %c0_3 = arith.constant 0 : index
    %c0_4 = arith.constant 0 : index
    %3 = vector.load %arg3[%c0_3, %c0_4] : memref<1x64xbf16, #tpu.memory_space<vmem>>, vector<1x64xbf16>
    %4 = arith.extf %3 : vector<1x64xbf16> to vector<1x64xf32>
    %5 = vector.broadcast %4 : vector<1x64xf32> to vector<16x64xf32>
    %6 = arith.addf %2, %5 : vector<16x64xf32>
    %cst_5 = arith.constant 0.000000e+00 : f32
    %7 = vector.broadcast %cst_5 : f32 to vector<16x64xf32>
    %8 = arith.maximumf %6, %7 : vector<16x64xf32>
    %9 = arith.truncf %8 : vector<16x64xf32> to vector<16x64xbf16>
    %c0_6 = arith.constant 0 : index
    %c0_7 = arith.constant 0 : index
    %10 = vector.load %arg4[%c0_6, %c0_7] : memref<64x32xbf16, #tpu.memory_space<vmem>>, vector<64x32xbf16>
    %cst_8 = arith.constant dense<0.000000e+00> : vector<16x32xf32>
    %11 = tpu.matmul %9, %10, %cst_8 {dimension_numbers = #tpu.dot_dimension_numbers<[1], [0], [0], [1], [0, 0, 1, 1], [], []>} : vector<16x64xbf16>, vector<64x32xbf16>, vector<16x32xf32> -> vector<16x32xf32>
    %c0_9 = arith.constant 0 : index
    %c0_10 = arith.constant 0 : index
    %12 = vector.load %arg5[%c0_9, %c0_10] : memref<1x32xbf16, #tpu.memory_space<vmem>>, vector<1x32xbf16>
    %13 = arith.extf %12 : vector<1x32xbf16> to vector<1x32xf32>
    %14 = vector.broadcast %13 : vector<1x32xf32> to vector<16x32xf32>
    %15 = arith.addf %11, %14 : vector<16x32xf32>
    %cst_11 = arith.constant 0.000000e+00 : f32
    %16 = vector.broadcast %cst_11 : f32 to vector<16x32xf32>
    %17 = arith.maximumf %15, %16 : vector<16x32xf32>
    %18 = arith.truncf %17 : vector<16x32xf32> to vector<16x32xbf16>
    %c0_12 = arith.constant 0 : index
    %c0_13 = arith.constant 0 : index
    %19 = vector.load %arg6[%c0_12, %c0_13] : memref<32x16xbf16, #tpu.memory_space<vmem>>, vector<32x16xbf16>
    %cst_14 = arith.constant dense<0.000000e+00> : vector<16x16xf32>
    %20 = tpu.matmul %18, %19, %cst_14 {dimension_numbers = #tpu.dot_dimension_numbers<[1], [0], [0], [1], [0, 0, 1, 1], [], []>} : vector<16x32xbf16>, vector<32x16xbf16>, vector<16x16xf32> -> vector<16x16xf32>
    %c0_15 = arith.constant 0 : index
    %c0_16 = arith.constant 0 : index
    %21 = vector.load %arg7[%c0_15, %c0_16] : memref<1x16xbf16, #tpu.memory_space<vmem>>, vector<1x16xbf16>
    %22 = arith.extf %21 : vector<1x16xbf16> to vector<1x16xf32>
    %23 = vector.broadcast %22 : vector<1x16xf32> to vector<16x16xf32>
    %24 = arith.addf %20, %23 : vector<16x16xf32>
    %cst_17 = arith.constant 0.000000e+00 : f32
    %25 = vector.broadcast %cst_17 : f32 to vector<16x16xf32>
    %26 = arith.maximumf %24, %25 : vector<16x16xf32>
    %27 = arith.truncf %26 : vector<16x16xf32> to vector<16x16xbf16>
    %c0_18 = arith.constant 0 : index
    %c0_19 = arith.constant 0 : index
    %28 = vector.load %arg8[%c0_18, %c0_19] : memref<16x32xbf16, #tpu.memory_space<vmem>>, vector<16x32xbf16>
    %cst_20 = arith.constant dense<0.000000e+00> : vector<16x32xf32>
    %29 = tpu.matmul %27, %28, %cst_20 {dimension_numbers = #tpu.dot_dimension_numbers<[1], [0], [0], [1], [0, 0, 1, 1], [], []>} : vector<16x16xbf16>, vector<16x32xbf16>, vector<16x32xf32> -> vector<16x32xf32>
    %c0_21 = arith.constant 0 : index
    %c0_22 = arith.constant 0 : index
    %30 = vector.load %arg9[%c0_21, %c0_22] : memref<1x32xbf16, #tpu.memory_space<vmem>>, vector<1x32xbf16>
    %31 = arith.extf %30 : vector<1x32xbf16> to vector<1x32xf32>
    %32 = vector.broadcast %31 : vector<1x32xf32> to vector<16x32xf32>
    %33 = arith.addf %29, %32 : vector<16x32xf32>
    %cst_23 = arith.constant 0.000000e+00 : f32
    %34 = vector.broadcast %cst_23 : f32 to vector<16x32xf32>
    %35 = arith.maximumf %33, %34 : vector<16x32xf32>
    %36 = arith.truncf %35 : vector<16x32xf32> to vector<16x32xbf16>
    %c0_24 = arith.constant 0 : index
    %c0_25 = arith.constant 0 : index
    %37 = vector.load %arg10[%c0_24, %c0_25] : memref<32x64xbf16, #tpu.memory_space<vmem>>, vector<32x64xbf16>
    %cst_26 = arith.constant dense<0.000000e+00> : vector<16x64xf32>
    %38 = tpu.matmul %36, %37, %cst_26 {dimension_numbers = #tpu.dot_dimension_numbers<[1], [0], [0], [1], [0, 0, 1, 1], [], []>} : vector<16x32xbf16>, vector<32x64xbf16>, vector<16x64xf32> -> vector<16x64xf32>
    %c0_27 = arith.constant 0 : index
    %c0_28 = arith.constant 0 : index
    %39 = vector.load %arg11[%c0_27, %c0_28] : memref<1x64xbf16, #tpu.memory_space<vmem>>, vector<1x64xbf16>
    %40 = arith.extf %39 : vector<1x64xbf16> to vector<1x64xf32>
    %41 = vector.broadcast %40 : vector<1x64xf32> to vector<16x64xf32>
    %42 = arith.addf %38, %41 : vector<16x64xf32>
    %cst_29 = arith.constant 0.000000e+00 : f32
    %43 = vector.broadcast %cst_29 : f32 to vector<16x64xf32>
    %44 = arith.maximumf %42, %43 : vector<16x64xf32>
    %45 = arith.truncf %44 : vector<16x64xf32> to vector<16x64xbf16>
    %c0_30 = arith.constant 0 : index
    %c0_31 = arith.constant 0 : index
    %46 = vector.load %arg12[%c0_30, %c0_31] : memref<64x115xbf16, #tpu.memory_space<vmem>>, vector<64x115xbf16>
    %cst_32 = arith.constant dense<0.000000e+00> : vector<16x115xf32>
    %47 = tpu.matmul %45, %46, %cst_32 {dimension_numbers = #tpu.dot_dimension_numbers<[1], [0], [0], [1], [0, 0, 1, 1], [], []>} : vector<16x64xbf16>, vector<64x115xbf16>, vector<16x115xf32> -> vector<16x115xf32>
    %c0_33 = arith.constant 0 : index
    %c0_34 = arith.constant 0 : index
    %48 = vector.load %arg13[%c0_33, %c0_34] : memref<1x115xbf16, #tpu.memory_space<vmem>>, vector<1x115xbf16>
    %49 = arith.extf %48 : vector<1x115xbf16> to vector<1x115xf32>
    %50 = vector.broadcast %49 : vector<1x115xf32> to vector<16x115xf32>
    %51 = arith.addf %47, %50 : vector<16x115xf32>
    %cst_35 = arith.constant -3.000000e+01 : f32
    %cst_36 = arith.constant 3.000000e+01 : f32
    %52 = vector.broadcast %cst_35 : f32 to vector<16x115xf32>
    %53 = arith.maximumf %52, %51 : vector<16x115xf32>
    %54 = vector.broadcast %cst_36 : f32 to vector<16x115xf32>
    %55 = arith.minimumf %54, %53 : vector<16x115xf32>
    %cst_37 = arith.constant 0.000000e+00 : f32
    %56 = vector.broadcast %cst_37 : f32 to vector<16x115xf32>
    %57 = arith.subf %56, %55 : vector<16x115xf32>
    %58 = math.exp %57 : vector<16x115xf32>
    %cst_38 = arith.constant 1.000000e+00 : f32
    %59 = vector.broadcast %cst_38 : f32 to vector<16x115xf32>
    %60 = arith.addf %59, %58 : vector<16x115xf32>
    %61 = tpu.reciprocal %60 {approx = true} : vector<16x115xf32> -> vector<16x115xf32>
    %62 = arith.truncf %61 : vector<16x115xf32> to vector<16x115xbf16>
    %c0_39 = arith.constant 0 : index
    %c0_40 = arith.constant 0 : index
    %63 = vector.load %arg14[%c0_39, %c0_40] : memref<16x115xbf16, #tpu.memory_space<vmem>>, vector<16x115xbf16>
    tpu.vector_store %arg14[%c0_39, %c0_40], %62 {strides = array<i32>} : memref<16x115xbf16, #tpu.memory_space<vmem>>, vector<16x115xbf16>,
    return
  }
  func.func @transform_0(%arg0: i32) -> (i32, i32) {
    %c0_i32 = arith.constant 0 : i32
    %c0_i32_0 = arith.constant 0 : i32
    return %arg0, %c0_i32 : i32, i32
  }
  func.func @transform_1(%arg0: i32) -> (i32, i32) {
    %c0_i32 = arith.constant 0 : i32
    %c0_i32_0 = arith.constant 0 : i32
    %c0_i32_1 = arith.constant 0 : i32
    return %c0_i32, %c0_i32_0 : i32, i32
  }
  func.func @transform_2(%arg0: i32) -> (i32, i32) {
    %c0_i32 = arith.constant 0 : i32
    %c0_i32_0 = arith.constant 0 : i32
    %c0_i32_1 = arith.constant 0 : i32
    return %c0_i32, %c0_i32_0 : i32, i32
  }
  func.func @transform_3(%arg0: i32) -> (i32, i32) {
    %c0_i32 = arith.constant 0 : i32
    %c0_i32_0 = arith.constant 0 : i32
    %c0_i32_1 = arith.constant 0 : i32
    return %c0_i32, %c0_i32_0 : i32, i32
  }
  func.func @transform_4(%arg0: i32) -> (i32, i32) {
    %c0_i32 = arith.constant 0 : i32
    %c0_i32_0 = arith.constant 0 : i32
    %c0_i32_1 = arith.constant 0 : i32
    return %c0_i32, %c0_i32_0 : i32, i32
  }
  func.func @transform_5(%arg0: i32) -> (i32, i32) {
    %c0_i32 = arith.constant 0 : i32
    %c0_i32_0 = arith.constant 0 : i32
    %c0_i32_1 = arith.constant 0 : i32
    return %c0_i32, %c0_i32_0 : i32, i32
  }
  func.func @transform_6(%arg0: i32) -> (i32, i32) {
    %c0_i32 = arith.constant 0 : i32
    %c0_i32_0 = arith.constant 0 : i32
    %c0_i32_1 = arith.constant 0 : i32
    return %c0_i32, %c0_i32_0 : i32, i32
  }
  func.func @transform_7(%arg0: i32) -> (i32, i32) {
    %c0_i32 = arith.constant 0 : i32
    %c0_i32_0 = arith.constant 0 : i32
    %c0_i32_1 = arith.constant 0 : i32
    return %c0_i32, %c0_i32_0 : i32, i32
  }
  func.func @transform_8(%arg0: i32) -> (i32, i32) {
    %c0_i32 = arith.constant 0 : i32
    %c0_i32_0 = arith.constant 0 : i32
    %c0_i32_1 = arith.constant 0 : i32
    return %c0_i32, %c0_i32_0 : i32, i32
  }
  func.func @transform_9(%arg0: i32) -> (i32, i32) {
    %c0_i32 = arith.constant 0 : i32
    %c0_i32_0 = arith.constant 0 : i32
    %c0_i32_1 = arith.constant 0 : i32
    return %c0_i32, %c0_i32_0 : i32, i32
  }
  func.func @transform_10(%arg0: i32) -> (i32, i32) {
    %c0_i32 = arith.constant 0 : i32
    %c0_i32_0 = arith.constant 0 : i32
    %c0_i32_1 = arith.constant 0 : i32
    return %c0_i32, %c0_i32_0 : i32, i32
  }
  func.func @transform_11(%arg0: i32) -> (i32, i32) {
    %c0_i32 = arith.constant 0 : i32
    %c0_i32_0 = arith.constant 0 : i32
    %c0_i32_1 = arith.constant 0 : i32
    return %c0_i32, %c0_i32_0 : i32, i32
  }
  func.func @transform_12(%arg0: i32) -> (i32, i32) {
    %c0_i32 = arith.constant 0 : i32
    %c0_i32_0 = arith.constant 0 : i32
    %c0_i32_1 = arith.constant 0 : i32
    return %c0_i32, %c0_i32_0 : i32, i32
  }
  func.func @transform_13(%arg0: i32) -> (i32, i32) {
    %c0_i32 = arith.constant 0 : i32
    %c0_i32_0 = arith.constant 0 : i32
    return %arg0, %c0_i32 : i32, i32
  }
}

</mosaic_0001>

<llo_original>
// kernel: tpu_custom_call.1
$region0: #{tpu_custom_call.1}
  #allocation0 [shape = 'u32[]', space=smem, size = 0x4, offset = 0x4, fixed_abs, tag = 'smem constant byte address 0x4 - core index']
  #allocation1 [shape = 'u32[144,128]{1,0:T(1,128)}', space=vmem, size = 0x12000, scoped, tag = 'internal scratch']
  %s0 = inlined_call_operand.vmem [shape: bf16[32,115], index: 0, kind: input, shape index: {}]
  %s1 = inlined_call_operand.vmem [shape: bf16[115,64], index: 1, kind: input, shape index: {}]
  %s2 = inlined_call_operand.vmem [shape: bf16[1,64], index: 2, kind: input, shape index: {}]
  %s3 = inlined_call_operand.vmem [shape: bf16[64,32], index: 3, kind: input, shape index: {}]
  %s4 = inlined_call_operand.vmem [shape: bf16[1,32], index: 4, kind: input, shape index: {}]
  %s5 = inlined_call_operand.vmem [shape: bf16[32,16], index: 5, kind: input, shape index: {}]
  %s6 = inlined_call_operand.vmem [shape: bf16[1,16], index: 6, kind: input, shape index: {}]
  %s7 = inlined_call_operand.vmem [shape: bf16[16,32], index: 7, kind: input, shape index: {}]
  %s8 = inlined_call_operand.vmem [shape: bf16[1,32], index: 8, kind: input, shape index: {}]
  %s9 = inlined_call_operand.vmem [shape: bf16[32,64], index: 9, kind: input, shape index: {}]
  %s10 = inlined_call_operand.vmem [shape: bf16[1,64], index: 10, kind: input, shape index: {}]
  %s11 = inlined_call_operand.vmem [shape: bf16[64,115], index: 11, kind: input, shape index: {}]
  %s12 = inlined_call_operand.vmem [shape: bf16[1,115], index: 12, kind: input, shape index: {}]
  %s13 = inlined_call_operand.hbm [shape: bf16[32,115], index: 13, kind: output, shape index: {}]
  %s14 = sld [smem:[#allocation0]]
  $region85: #{tpu_custom_call.1} parent=0
    _
  %s16 = ssub.s32 1, %s14
  %s17 = scalar_select 0, %s16, %s14
  $region1: #{tpu_custom_call.1} parent=0
    #allocation2 [shape = 'u8[8192]{0}', space=vmem, size = 0x2000, scoped, tag = 'output window, operand 0']
    #allocation3 [shape = 's32[2]{0}', space=sflag, size = 0x8, scoped, tag = 'scoped memory for tpu_custom_call.1']
    %18 = vsyncpa [#allocation3], 0
    %s19 = scalar_lea.sflag [#allocation3], 1
    %20 = vsyncpa %s19, 0
    loop: start=0, step=1, limit=4
    $region2: #{tpu_custom_call.1} parent=1 // loop_pre_header
      _
    $region3: #{tpu_custom_call.1} parent=1 // loop_header
      %s22 = sphi 0, %s26
      %p23 = scmp.ge.s32.totalorder %s22, 4
      %s32 = sphi 0, %s34
      %s35 = sphi 0, %s32
      %s36 = sphi 0, %s35
      %s52 = sphi 0, %s36
      %s56 = sphi 0, %s56
      %s58 = sphi 0, %s56
      %s59 = sphi 0, %s58
      %s73 = sphi 0, %s59
      %s77 = sphi 0, %s77
      %s79 = sphi 0, %s77
      %s80 = sphi 0, %s79
      %s94 = sphi 0, %s80
      %s98 = sphi 0, %s98
      %s100 = sphi 0, %s98
      %s101 = sphi 0, %s100
      %s115 = sphi 0, %s101
      %s119 = sphi 0, %s119
      %s121 = sphi 0, %s119
      %s122 = sphi 0, %s121
      %s136 = sphi 0, %s122
      %s140 = sphi 0, %s140
      %s142 = sphi 0, %s140
      %s143 = sphi 0, %s142
      %s157 = sphi 0, %s143
      %s161 = sphi 0, %s161
      %s163 = sphi 0, %s161
      %s164 = sphi 0, %s163
      %s178 = sphi 0, %s164
      %s182 = sphi 0, %s182
      %s184 = sphi 0, %s182
      %s185 = sphi 0, %s184
      %s199 = sphi 0, %s185
      %s203 = sphi 0, %s203
      %s205 = sphi 0, %s203
      %s206 = sphi 0, %s205
      %s220 = sphi 0, %s206
      %s224 = sphi 0, %s224
      %s226 = sphi 0, %s224
      %s227 = sphi 0, %s226
      %s241 = sphi 0, %s227
      %s245 = sphi 0, %s245
      %s247 = sphi 0, %s245
      %s248 = sphi 0, %s247
      %s262 = sphi 0, %s248
      %s266 = sphi 0, %s266
      %s268 = sphi 0, %s266
      %s269 = sphi 0, %s268
      %s283 = sphi 0, %s269
      %s287 = sphi 0, %s287
      %s289 = sphi 0, %s287
      %s290 = sphi 0, %s289
      %s304 = sphi 0, %s290
      %s310 = sphi 0, %s312
      %s313 = sphi 0, %s310
      %s314 = sphi 0, %s313
      %s330 = sphi 0, %s314
    $region4: #{tpu_custom_call.1} parent=1 // loop_header_branch
      %25 = sbr.rel (%p23) target = $region8
    $region5: #{tpu_custom_call.1} parent=1 // loop_body
      %s27 = ssub.s32 %s22, 1
      %s28 = ssub.s32 %s22, 2
      %s29 = sadd.s32 %s22, 1
      %s30 = ssub.s32 %s22, %s29
      %p31 = scmp.eq.s32.totalorder %s30, 0
      %s33 = sadd.s32 %s32, 1
      %s34 = scalar_select %p31, %s32, %s33
      %p37 = pneg %p31
      %p38 = scmp.eq.s32.totalorder %s22, 1
      %p39 = por %p37, %p38
      %p40 = scmp.ne.s32.totalorder %s32, %s35
      %p41 = scmp.eq.s32.totalorder %s22, 0
      %p42 = por %p40, %p41
      %p43 = scmp.ne.s32.totalorder %s32, %s35
      %p44 = scmp.eq.s32.totalorder %s27, 1
      %p45 = por %p43, %p44
      %p46 = scmp.ne.s32.totalorder %s35, %s36
      %p47 = scmp.eq.s32.totalorder %s27, 0
      %p48 = por %p46, %p47
      %p49 = scmp.ne.s32.totalorder %s35, %s36
      %p50 = scmp.eq.s32.totalorder %s28, 1
      %p51 = por %p49, %p50
      %p53 = scmp.ne.s32.totalorder %s36, %s52
      %p54 = scmp.eq.s32.totalorder %s28, 0
      %p55 = por %p53, %p54
      %s57 = sadd.s32 %s56, 1
      %p60 = scmp.eq.s32.totalorder %s22, 1
      %p61 = scmp.ne.s32.totalorder %s56, %s58
      %p62 = scmp.eq.s32.totalorder %s22, 0
      %p63 = por %p61, %p62
      %p64 = scmp.ne.s32.totalorder %s56, %s58
      %p65 = scmp.eq.s32.totalorder %s27, 1
      %p66 = por %p64, %p65
      %p67 = scmp.ne.s32.totalorder %s58, %s59
      %p68 = scmp.eq.s32.totalorder %s27, 0
      %p69 = por %p67, %p68
      %p70 = scmp.ne.s32.totalorder %s58, %s59
      %p71 = scmp.eq.s32.totalorder %s28, 1
      %p72 = por %p70, %p71
      %p74 = scmp.ne.s32.totalorder %s59, %s73
      %p75 = scmp.eq.s32.totalorder %s28, 0
      %p76 = por %p74, %p75
      %s78 = sadd.s32 %s77, 1
      %p81 = scmp.eq.s32.totalorder %s22, 1
      %p82 = scmp.ne.s32.totalorder %s77, %s79
      %p83 = scmp.eq.s32.totalorder %s22, 0
      %p84 = por %p82, %p83
      %p85 = scmp.ne.s32.totalorder %s77, %s79
      %p86 = scmp.eq.s32.totalorder %s27, 1
      %p87 = por %p85, %p86
      %p88 = scmp.ne.s32.totalorder %s79, %s80
      %p89 = scmp.eq.s32.totalorder %s27, 0
      %p90 = por %p88, %p89
      %p91 = scmp.ne.s32.totalorder %s79, %s80
      %p92 = scmp.eq.s32.totalorder %s28, 1
      %p93 = por %p91, %p92
      %p95 = scmp.ne.s32.totalorder %s80, %s94
      %p96 = scmp.eq.s32.totalorder %s28, 0
      %p97 = por %p95, %p96
      %s99 = sadd.s32 %s98, 1
      %p102 = scmp.eq.s32.totalorder %s22, 1
      %p103 = scmp.ne.s32.totalorder %s98, %s100
      %p104 = scmp.eq.s32.totalorder %s22, 0
      %p105 = por %p103, %p104
      %p106 = scmp.ne.s32.totalorder %s98, %s100
      %p107 = scmp.eq.s32.totalorder %s27, 1
      %p108 = por %p106, %p107
      %p109 = scmp.ne.s32.totalorder %s100, %s101
      %p110 = scmp.eq.s32.totalorder %s27, 0
      %p111 = por %p109, %p110
      %p112 = scmp.ne.s32.totalorder %s100, %s101
      %p113 = scmp.eq.s32.totalorder %s28, 1
      %p114 = por %p112, %p113
      %p116 = scmp.ne.s32.totalorder %s101, %s115
      %p117 = scmp.eq.s32.totalorder %s28, 0
      %p118 = por %p116, %p117
      %s120 = sadd.s32 %s119, 1
      %p123 = scmp.eq.s32.totalorder %s22, 1
      %p124 = scmp.ne.s32.totalorder %s119, %s121
      %p125 = scmp.eq.s32.totalorder %s22, 0
      %p126 = por %p124, %p125
      %p127 = scmp.ne.s32.totalorder %s119, %s121
      %p128 = scmp.eq.s32.totalorder %s27, 1
      %p129 = por %p127, %p128
      %p130 = scmp.ne.s32.totalorder %s121, %s122
      %p131 = scmp.eq.s32.totalorder %s27, 0
      %p132 = por %p130, %p131
      %p133 = scmp.ne.s32.totalorder %s121, %s122
      %p134 = scmp.eq.s32.totalorder %s28, 1
      %p135 = por %p133, %p134
      %p137 = scmp.ne.s32.totalorder %s122, %s136
      %p138 = scmp.eq.s32.totalorder %s28, 0
      %p139 = por %p137, %p138
      %s141 = sadd.s32 %s140, 1
      %p144 = scmp.eq.s32.totalorder %s22, 1
      %p145 = scmp.ne.s32.totalorder %s140, %s142
      %p146 = scmp.eq.s32.totalorder %s22, 0
      %p147 = por %p145, %p146
      %p148 = scmp.ne.s32.totalorder %s140, %s142
      %p149 = scmp.eq.s32.totalorder %s27, 1
      %p150 = por %p148, %p149
      %p151 = scmp.ne.s32.totalorder %s142, %s143
      %p152 = scmp.eq.s32.totalorder %s27, 0
      %p153 = por %p151, %p152
      %p154 = scmp.ne.s32.totalorder %s142, %s143
      %p155 = scmp.eq.s32.totalorder %s28, 1
      %p156 = por %p154, %p155
      %p158 = scmp.ne.s32.totalorder %s143, %s157
      %p159 = scmp.eq.s32.totalorder %s28, 0
      %p160 = por %p158, %p159
      %s162 = sadd.s32 %s161, 1
      %p165 = scmp.eq.s32.totalorder %s22, 1
      %p166 = scmp.ne.s32.totalorder %s161, %s163
      %p167 = scmp.eq.s32.totalorder %s22, 0
      %p168 = por %p166, %p167
      %p169 = scmp.ne.s32.totalorder %s161, %s163
      %p170 = scmp.eq.s32.totalorder %s27, 1
      %p171 = por %p169, %p170
      %p172 = scmp.ne.s32.totalorder %s163, %s164
      %p173 = scmp.eq.s32.totalorder %s27, 0
      %p174 = por %p172, %p173
      %p175 = scmp.ne.s32.totalorder %s163, %s164
      %p176 = scmp.eq.s32.totalorder %s28, 1
      %p177 = por %p175, %p176
      %p179 = scmp.ne.s32.totalorder %s164, %s178
      %p180 = scmp.eq.s32.totalorder %s28, 0
      %p181 = por %p179, %p180
      %s183 = sadd.s32 %s182, 1
      %p186 = scmp.eq.s32.totalorder %s22, 1
      %p187 = scmp.ne.s32.totalorder %s182, %s184
      %p188 = scmp.eq.s32.totalorder %s22, 0
      %p189 = por %p187, %p188
      %p190 = scmp.ne.s32.totalorder %s182, %s184
      %p191 = scmp.eq.s32.totalorder %s27, 1
      %p192 = por %p190, %p191
      %p193 = scmp.ne.s32.totalorder %s184, %s185
      %p194 = scmp.eq.s32.totalorder %s27, 0
      %p195 = por %p193, %p194
      %p196 = scmp.ne.s32.totalorder %s184, %s185
      %p197 = scmp.eq.s32.totalorder %s28, 1
      %p198 = por %p196, %p197
      %p200 = scmp.ne.s32.totalorder %s185, %s199
      %p201 = scmp.eq.s32.totalorder %s28, 0
      %p202 = por %p200, %p201
      %s204 = sadd.s32 %s203, 1
      %p207 = scmp.eq.s32.totalorder %s22, 1
      %p208 = scmp.ne.s32.totalorder %s203, %s205
      %p209 = scmp.eq.s32.totalorder %s22, 0
      %p210 = por %p208, %p209
      %p211 = scmp.ne.s32.totalorder %s203, %s205
      %p212 = scmp.eq.s32.totalorder %s27, 1
      %p213 = por %p211, %p212
      %p214 = scmp.ne.s32.totalorder %s205, %s206
      %p215 = scmp.eq.s32.totalorder %s27, 0
      %p216 = por %p214, %p215
      %p217 = scmp.ne.s32.totalorder %s205, %s206
      %p218 = scmp.eq.s32.totalorder %s28, 1
      %p219 = por %p217, %p218
      %p221 = scmp.ne.s32.totalorder %s206, %s220
      %p222 = scmp.eq.s32.totalorder %s28, 0
      %p223 = por %p221, %p222
      %s225 = sadd.s32 %s224, 1
      %p228 = scmp.eq.s32.totalorder %s22, 1
      %p229 = scmp.ne.s32.totalorder %s224, %s226
      %p230 = scmp.eq.s32.totalorder %s22, 0
      %p231 = por %p229, %p230
      %p232 = scmp.ne.s32.totalorder %s224, %s226
      %p233 = scmp.eq.s32.totalorder %s27, 1
      %p234 = por %p232, %p233
      %p235 = scmp.ne.s32.totalorder %s226, %s227
      %p236 = scmp.eq.s32.totalorder %s27, 0
      %p237 = por %p235, %p236
      %p238 = scmp.ne.s32.totalorder %s226, %s227
      %p239 = scmp.eq.s32.totalorder %s28, 1
      %p240 = por %p238, %p239
      %p242 = scmp.ne.s32.totalorder %s227, %s241
      %p243 = scmp.eq.s32.totalorder %s28, 0
      %p244 = por %p242, %p243
      %s246 = sadd.s32 %s245, 1
      %p249 = scmp.eq.s32.totalorder %s22, 1
      %p250 = scmp.ne.s32.totalorder %s245, %s247
      %p251 = scmp.eq.s32.totalorder %s22, 0
      %p252 = por %p250, %p251
      %p253 = scmp.ne.s32.totalorder %s245, %s247
      %p254 = scmp.eq.s32.totalorder %s27, 1
      %p255 = por %p253, %p254
      %p256 = scmp.ne.s32.totalorder %s247, %s248
      %p257 = scmp.eq.s32.totalorder %s27, 0
      %p258 = por %p256, %p257
      %p259 = scmp.ne.s32.totalorder %s247, %s248
      %p260 = scmp.eq.s32.totalorder %s28, 1
      %p261 = por %p259, %p260
      %p263 = scmp.ne.s32.totalorder %s248, %s262
      %p264 = scmp.eq.s32.totalorder %s28, 0
      %p265 = por %p263, %p264
      %s267 = sadd.s32 %s266, 1
      %p270 = scmp.eq.s32.totalorder %s22, 1
      %p271 = scmp.ne.s32.totalorder %s266, %s268
      %p272 = scmp.eq.s32.totalorder %s22, 0
      %p273 = por %p271, %p272
      %p274 = scmp.ne.s32.totalorder %s266, %s268
      %p275 = scmp.eq.s32.totalorder %s27, 1
      %p276 = por %p274, %p275
      %p277 = scmp.ne.s32.totalorder %s268, %s269
      %p278 = scmp.eq.s32.totalorder %s27, 0
      %p279 = por %p277, %p278
      %p280 = scmp.ne.s32.totalorder %s268, %s269
      %p281 = scmp.eq.s32.totalorder %s28, 1
      %p282 = por %p280, %p281
      %p284 = scmp.ne.s32.totalorder %s269, %s283
      %p285 = scmp.eq.s32.totalorder %s28, 0
      %p286 = por %p284, %p285
      %s288 = sadd.s32 %s287, 1
      %p291 = scmp.eq.s32.totalorder %s22, 1
      %p292 = scmp.ne.s32.totalorder %s287, %s289
      %p293 = scmp.eq.s32.totalorder %s22, 0
      %p294 = por %p292, %p293
      %p295 = scmp.ne.s32.totalorder %s287, %s289
      %p296 = scmp.eq.s32.totalorder %s27, 1
      %p297 = por %p295, %p296
      %p298 = scmp.ne.s32.totalorder %s289, %s290
      %p299 = scmp.eq.s32.totalorder %s27, 0
      %p300 = por %p298, %p299
      %p301 = scmp.ne.s32.totalorder %s289, %s290
      %p302 = scmp.eq.s32.totalorder %s28, 1
      %p303 = por %p301, %p302
      %p305 = scmp.ne.s32.totalorder %s290, %s304
      %p306 = scmp.eq.s32.totalorder %s28, 0
      %p307 = por %p305, %p306
      %s308 = ssub.s32 %s22, %s29
      %p309 = scmp.eq.s32.totalorder %s308, 0
      %s311 = sadd.s32 %s310, 1
      %s312 = scalar_select %p309, %s310, %s311
      %p315 = pneg %p309
      %p316 = scmp.eq.s32.totalorder %s22, 1
      %p317 = por %p315, %p316
      %p318 = scmp.ne.s32.totalorder %s310, %s313
      %p319 = scmp.eq.s32.totalorder %s22, 0
      %p320 = por %p318, %p319
      %p321 = scmp.ne.s32.totalorder %s310, %s313
      %p322 = scmp.eq.s32.totalorder %s27, 1
      %p323 = por %p321, %p322
      %p324 = scmp.ne.s32.totalorder %s313, %s314
      %p325 = scmp.eq.s32.totalorder %s27, 0
      %p326 = por %p324, %p325
      %p327 = scmp.ne.s32.totalorder %s313, %s314
      %p328 = scmp.eq.s32.totalorder %s28, 1
      %p329 = por %p327, %p328
      %p331 = scmp.ne.s32.totalorder %s314, %s330
      %p332 = scmp.eq.s32.totalorder %s28, 0
      %p333 = por %p331, %p332
      %p334 = scmp.le.s32.totalorder 1, %s22
      %p335 = scmp.lt.s32.totalorder %s22, 3
      %p336 = pnand %p334, %p335
      %p337 = pneg %p336
      // Predicated region
      $region9: #{tpu_custom_call.1} parent=5 // pred_check
        _
      $region10: #{tpu_custom_call.1} parent=5 // pred_check_branch
        %339 = sbr.rel (%p336) target = $region12
      $region11: #{tpu_custom_call.1} parent=5 // pred_region
        %s340 = ssub.s32 %s22, 1
        // Predicated region
        $region13: #{tpu_custom_call.1} parent=11 // pred_check
          %p341 = pneg %p69
        $region14: #{tpu_custom_call.1} parent=11 // pred_check_branch
          %343 = sbr.rel (%p341) target = $region16
        $region15: #{tpu_custom_call.1} parent=11 // pred_region
          _
        $region16: #{tpu_custom_call.1} parent=11 // pred_fallthru
          _
        // Predicated region
        $region17: #{tpu_custom_call.1} parent=11 // pred_check
          %p344 = pneg %p90
        $region18: #{tpu_custom_call.1} parent=11 // pred_check_branch
          %346 = sbr.rel (%p344) target = $region20
        $region19: #{tpu_custom_call.1} parent=11 // pred_region
          _
        $region20: #{tpu_custom_call.1} parent=11 // pred_fallthru
          _
        // Predicated region
        $region21: #{tpu_custom_call.1} parent=11 // pred_check
          %p347 = pneg %p111
        $region22: #{tpu_custom_call.1} parent=11 // pred_check_branch
          %349 = sbr.rel (%p347) target = $region24
        $region23: #{tpu_custom_call.1} parent=11 // pred_region
          _
        $region24: #{tpu_custom_call.1} parent=11 // pred_fallthru
          _
        // Predicated region
        $region25: #{tpu_custom_call.1} parent=11 // pred_check
          %p350 = pneg %p132
        $region26: #{tpu_custom_call.1} parent=11 // pred_check_branch
          %352 = sbr.rel (%p350) target = $region28
        $region27: #{tpu_custom_call.1} parent=11 // pred_region
          _
        $region28: #{tpu_custom_call.1} parent=11 // pred_fallthru
          _
        // Predicated region
        $region29: #{tpu_custom_call.1} parent=11 // pred_check
          %p353 = pneg %p153
        $region30: #{tpu_custom_call.1} parent=11 // pred_check_branch
          %355 = sbr.rel (%p353) target = $region32
        $region31: #{tpu_custom_call.1} parent=11 // pred_region
          _
        $region32: #{tpu_custom_call.1} parent=11 // pred_fallthru
          _
        // Predicated region
        $region33: #{tpu_custom_call.1} parent=11 // pred_check
          %p356 = pneg %p174
        $region34: #{tpu_custom_call.1} parent=11 // pred_check_branch
          %358 = sbr.rel (%p356) target = $region36
        $region35: #{tpu_custom_call.1} parent=11 // pred_region
          _
        $region36: #{tpu_custom_call.1} parent=11 // pred_fallthru
          _
        // Predicated region
        $region37: #{tpu_custom_call.1} parent=11 // pred_check
          %p359 = pneg %p195
        $region38: #{tpu_custom_call.1} parent=11 // pred_check_branch
          %361 = sbr.rel (%p359) target = $region40
        $region39: #{tpu_custom_call.1} parent=11 // pred_region
          _
        $region40: #{tpu_custom_call.1} parent=11 // pred_fallthru
          _
        // Predicated region
        $region41: #{tpu_custom_call.1} parent=11 // pred_check
          %p362 = pneg %p216
        $region42: #{tpu_custom_call.1} parent=11 // pred_check_branch
          %364 = sbr.rel (%p362) target = $region44
        $region43: #{tpu_custom_call.1} parent=11 // pred_region
          _
        $region44: #{tpu_custom_call.1} parent=11 // pred_fallthru
          _
        // Predicated region
        $region45: #{tpu_custom_call.1} parent=11 // pred_check
          %p365 = pneg %p237
        $region46: #{tpu_custom_call.1} parent=11 // pred_check_branch
          %367 = sbr.rel (%p365) target = $region48
        $region47: #{tpu_custom_call.1} parent=11 // pred_region
          _
        $region48: #{tpu_custom_call.1} parent=11 // pred_fallthru
          _
        // Predicated region
        $region49: #{tpu_custom_call.1} parent=11 // pred_check
          %p368 = pneg %p258
        $region50: #{tpu_custom_call.1} parent=11 // pred_check_branch
          %370 = sbr.rel (%p368) target = $region52
        $region51: #{tpu_custom_call.1} parent=11 // pred_region
          _
        $region52: #{tpu_custom_call.1} parent=11 // pred_fallthru
          _
        // Predicated region
        $region53: #{tpu_custom_call.1} parent=11 // pred_check
          %p371 = pneg %p279
        $region54: #{tpu_custom_call.1} parent=11 // pred_check_branch
          %373 = sbr.rel (%p371) target = $region56
        $region55: #{tpu_custom_call.1} parent=11 // pred_region
          _
        $region56: #{tpu_custom_call.1} parent=11 // pred_fallthru
          _
        // Predicated region
        $region57: #{tpu_custom_call.1} parent=11 // pred_check
          %p374 = pneg %p300
        $region58: #{tpu_custom_call.1} parent=11 // pred_check_branch
          %376 = sbr.rel (%p374) target = $region60
        $region59: #{tpu_custom_call.1} parent=11 // pred_region
          _
        $region60: #{tpu_custom_call.1} parent=11 // pred_fallthru
          _
      $region12: #{tpu_custom_call.1} parent=5 // pred_fallthru
        _
      %p377 = scmp.lt.s32.totalorder %s22, 2
      // Predicated region
      $region61: #{tpu_custom_call.1} parent=5 // pred_check
        %p378 = pneg %p377
      $region62: #{tpu_custom_call.1} parent=5 // pred_check_branch
        %380 = sbr.rel (%p378) target = $region64
      $region63: #{tpu_custom_call.1} parent=5 // pred_region
        // Predicated region
        $region65: #{tpu_custom_call.1} parent=63 // pred_check
          %p381 = pneg %p42
        $region66: #{tpu_custom_call.1} parent=63 // pred_check_branch
          %383 = sbr.rel (%p381) target = $region68
        $region67: #{tpu_custom_call.1} parent=63 // pred_region
          %s384 = smul.u32 2, %s22
          %p385 = scmp.lt.s32.totalorder %s384, 3
          %s386 = scalar_select %p385, %s384, 3
          %s387 = smul.addr %s386, 4
          %s388 = scalar_lea.vmem %s0, %s387
          %s389 = smul.u32 2, %s22
        $region68: #{tpu_custom_call.1} parent=63 // pred_fallthru
          _
      $region64: #{tpu_custom_call.1} parent=5 // pred_fallthru
        _
      %p390 = scmp.le.s32.totalorder 1, %s22
      %p391 = scmp.lt.s32.totalorder %s22, 3
      %p392 = pnand %p390, %p391
      %p393 = pneg %p392
      // Predicated region
      $region69: #{tpu_custom_call.1} parent=5 // pred_check
        _
      $region70: #{tpu_custom_call.1} parent=5 // pred_check_branch
        %395 = sbr.rel (%p392) target = $region72
      $region71: #{tpu_custom_call.1} parent=5 // pred_region
        %s396 = ssub.s32 %s22, 1
        %s397 = smul.u32 2, %s27
        %p398 = scmp.lt.s32.totalorder %s397, 3
        %s399 = scalar_select %p398, %s397, 3
        %s400 = smul.addr %s399, 4
        %s401 = scalar_lea.vmem %s0, %s400
        %p402 = pneg %p48
        %p403 = pneg %p45
        %p404 = pneg %p69
        %p405 = pneg %p66
        %p406 = pneg %p90
        %p407 = pneg %p87
        %p408 = pneg %p111
        %p409 = pneg %p108
        %p410 = pneg %p132
        %p411 = pneg %p129
        %p412 = pneg %p153
        %p413 = pneg %p150
        %p414 = pneg %p174
        %p415 = pneg %p171
        %p416 = pneg %p195
        %p417 = pneg %p192
        %p418 = pneg %p216
        %p419 = pneg %p213
        %p420 = pneg %p237
        %p421 = pneg %p234
        %p422 = pneg %p258
        %p423 = pneg %p255
        %p424 = pneg %p279
        %p425 = pneg %p276
        %p426 = pneg %p300
        %p427 = pneg %p297
        %p428 = pneg %p326
        %p429 = pneg %p323
        %s430 = sand.u32 %s313, 1
        %s431 = scalar_lea.sflag [#allocation3], %s430
        %s432 = sand.u32 %s313, 1
        %s433 = smul.addr %s432, 8
        %s434 = scalar_lea.vmem [#allocation2], %s433
        %s435 = smul.u32 2, %s27
        %p436 = scmp.lt.s32.totalorder %s435, 3
        %s437 = scalar_select %p436, %s435, 3
        %s438 = smul.addr %s437, 4
        %s439 = scalar_lea.vmem %s0, %s438
        %s440 = smul.u32 2, %s27
        %s441 = smul.u32 2, %s27
        %v443 = vld [vmem:[%s439] sm:$0xf]
        %v444 = vld [vmem:[%s439 + $0x4] sm:$0xf]
        %v445 = vld [vmem:[%s1] sm:$0xf]
        %v446 = vld [vmem:[%s1 + $0x4] sm:$0xf]
        %v447 = vld [vmem:[%s1 + $0x8] sm:$0xf]
        %v448 = vld [vmem:[%s1 + $0xc] sm:$0xf]
        %v449 = vld [vmem:[%s1 + $0x10] sm:$0xf]
        %v450 = vld [vmem:[%s1 + $0x14] sm:$0xf]
        %v451 = vld [vmem:[%s1 + $0x18] sm:$0xf]
        %v452 = vld [vmem:[%s1 + $0x1c] sm:$0xf]
        %v453 = vld [vmem:[%s1 + $0x20] sm:$0xf]
        %v454 = vld [vmem:[%s1 + $0x24] sm:$0xf]
        %v455 = vld [vmem:[%s1 + $0x28] sm:$0xf]
        %v456 = vld [vmem:[%s1 + $0x2c] sm:$0xf]
        %v457 = vld [vmem:[%s1 + $0x30] sm:$0xf]
        %v458 = vld [vmem:[%s1 + $0x34] sm:$0xf]
        %v459 = vld [vmem:[%s1 + $0x38] sm:$0x3]
        %v460 = vld [vmem:[%s2] sm:$0x1]
        %v461 = vunpack.c.l.bf16 %v460
        %v462 = vlaneseq
        %v463 = vshrl.u32 %v462, 7
        %v464 = vsub.s32 0, %v463
        %v465 = vrot.slane %v461, %v464
        %v468 = vunpack.c.l.b16 %v443
        %v469 = vunpack.c.l.b16 %v444
        %v470 = vpack.c.b16 %v469, %v468
        %v486 = vunpack.c.l.b16 %v445
        %v487 = vunpack.c.l.b16 %v446
        %v488 = vunpack.c.l.b16 %v447
        %v489 = vunpack.c.l.b16 %v448
        %v490 = vunpack.c.l.b16 %v449
        %v491 = vunpack.c.l.b16 %v450
        %v492 = vunpack.c.l.b16 %v451
        %v493 = vunpack.c.l.b16 %v452
        %v494 = vunpack.c.l.b16 %v453
        %v495 = vunpack.c.l.b16 %v454
        %v496 = vunpack.c.l.b16 %v455
        %v497 = vunpack.c.l.b16 %v456
        %v498 = vunpack.c.l.b16 %v457
        %v499 = vunpack.c.l.b16 %v458
        %v500 = vunpack.c.l.b16 %v459
        %v501 = vpack.c.b16 %v487, %v486
        %v502 = vpack.c.b16 %v489, %v488
        %v503 = vpack.c.b16 %v491, %v490
        %v504 = vpack.c.b16 %v493, %v492
        %v505 = vpack.c.b16 %v495, %v494
        %v506 = vpack.c.b16 %v497, %v496
        %v507 = vpack.c.b16 %v499, %v498
        %v508 = vpack.c.b16 %v500, %v500
        %vm516 = vcmask 941056
        %v518 = vsel %vm516, %v470, 0
        %vm520 = vcmask 1040384
        %vm521 = vcmask 1041408
        %v522 = vsel %vm520, 4294967295, 65535
        %v523 = vsel %vm521, %v522, 0
        %v525 = vand.u32 %v508, %v523
        %527 = vmatprep.subr.bf16.mxu0 0
        %528 = vmatpush1.bf16.msra.mxu0 %v501
        %529 = vmatprep.subr.bf16.mxu0 0
        %530 = vmatpush1.bf16.msra.mxu0 %v502
        %531 = vmatprep.subr.bf16.mxu0 0
        %532 = vmatpush1.bf16.msra.mxu0 %v503
        %533 = vmatprep.subr.bf16.mxu0 0
        %534 = vmatpush1.bf16.msra.mxu0 %v504
        %535 = vmatprep.subr.bf16.mxu0 0
        %536 = vmatpush1.bf16.msra.mxu0 %v505
        %537 = vmatprep.subr.bf16.mxu0 0
        %538 = vmatpush1.bf16.msra.mxu0 %v506
        %539 = vmatprep.subr.bf16.mxu0 0
        %540 = vmatpush1.bf16.msra.mxu0 %v507
        %541 = vmatprep.subr.bf16.mxu0 0
        %542 = vmatpush1.bf16.msra.mxu0 %v525
        %543 = vmatprep.subr.bf16.mxu0 0
        %544 = vmatpush1.bf16.msra.mxu0 0
        %545 = vmatprep.subr.bf16.mxu0 0
        %546 = vmatpush1.bf16.msra.mxu0 0
        %547 = vmatprep.subr.bf16.mxu0 0
        %548 = vmatpush1.bf16.msra.mxu0 0
        %549 = vmatprep.subr.bf16.mxu0 0
        %550 = vmatpush1.bf16.msra.mxu0 0
        %551 = vmatprep.subr.bf16.mxu0 0
        %552 = vmatpush1.bf16.msra.mxu0 0
        %553 = vmatprep.subr.bf16.mxu0 0
        %554 = vmatpush1.bf16.msra.mxu0 0
        %555 = vmatprep.subr.bf16.mxu0 0
        %556 = vmatpush1.bf16.msra.mxu0 0
        %557 = vmatprep.subr.bf16.mxu0 0
        %558 = vmatpush1.bf16.msra.mxu0 0
        %559 = vmatprep.mubr.bf16.mxu0 0
        %560 = vmatmul.mubr.bf16.gmra.mrb[0].mxu0 %v518
        %v561 = vpop.f32.mrb[0].mxu0
        %v562 = vadd.f32 %v465, %v561
        %v563 = vpop.f32.mrb[0].mxu0
        %v564 = vpop.f32.mrb[0].mxu0
        %v565 = vadd.f32 %v465, %v564
        %v566 = vpop.f32.mrb[0].mxu0
        %567 = vdwg.mxu0
        %v568 = vmax.f32 %v562, 0.0
        %v569 = vmax.f32 %v565, 0.0
        %v570 = vpack.c.bf16 %v569, %v568
        %v571 = vld [vmem:[%s3] sm:$0xf]
        %v572 = vld [vmem:[%s3 + $0x4] sm:$0xf]
        %v573 = vld [vmem:[%s3 + $0x8] sm:$0xf]
        %v574 = vld [vmem:[%s3 + $0xc] sm:$0xf]
        %v575 = vld [vmem:[%s3 + $0x10] sm:$0xf]
        %v576 = vld [vmem:[%s3 + $0x14] sm:$0xf]
        %v577 = vld [vmem:[%s3 + $0x18] sm:$0xf]
        %v578 = vld [vmem:[%s3 + $0x1c] sm:$0xf]
        %v579 = vld [vmem:[%s4] sm:$0x1]
        %v580 = vunpack.c.l.bf16 %v579
        %v581 = vlaneseq
        %v582 = vshrl.u32 %v581, 7
        %v583 = vsub.s32 0, %v582
        %v584 = vrot.slane %v580, %v583
        %v593 = vunpack.c.l.b16 %v571
        %v594 = vunpack.c.l.b16 %v572
        %v595 = vunpack.c.l.b16 %v573
        %v596 = vunpack.c.l.b16 %v574
        %v597 = vunpack.c.l.b16 %v575
        %v598 = vunpack.c.l.b16 %v576
        %v599 = vunpack.c.l.b16 %v577
        %v600 = vunpack.c.l.b16 %v578
        %v601 = vpack.c.b16 %v594, %v593
        %v602 = vpack.c.b16 %v596, %v595
        %v603 = vpack.c.b16 %v598, %v597
        %v604 = vpack.c.b16 %v600, %v599
        %vm609 = vcmask 523264
        %v611 = vsel %vm609, %v570, 0
        %613 = vmatprep.subr.bf16.mxu0 0
        %614 = vmatpush1.bf16.msra.mxu0 %v601
        %615 = vmatprep.subr.bf16.mxu0 0
        %616 = vmatpush1.bf16.msra.mxu0 %v602
        %617 = vmatprep.subr.bf16.mxu0 0
        %618 = vmatpush1.bf16.msra.mxu0 %v603
        %619 = vmatprep.subr.bf16.mxu0 0
        %620 = vmatpush1.bf16.msra.mxu0 %v604
        %621 = vmatprep.subr.bf16.mxu0 0
        %622 = vmatpush1.bf16.msra.mxu0 0
        %623 = vmatprep.subr.bf16.mxu0 0
        %624 = vmatpush1.bf16.msra.mxu0 0
        %625 = vmatprep.subr.bf16.mxu0 0
        %626 = vmatpush1.bf16.msra.mxu0 0
        %627 = vmatprep.subr.bf16.mxu0 0
        %628 = vmatpush1.bf16.msra.mxu0 0
        %629 = vmatprep.subr.bf16.mxu0 0
        %630 = vmatpush1.bf16.msra.mxu0 0
        %631 = vmatprep.subr.bf16.mxu0 0
        %632 = vmatpush1.bf16.msra.mxu0 0
        %633 = vmatprep.subr.bf16.mxu0 0
        %634 = vmatpush1.bf16.msra.mxu0 0
        %635 = vmatprep.subr.bf16.mxu0 0
        %636 = vmatpush1.bf16.msra.mxu0 0
        %637 = vmatprep.subr.bf16.mxu0 0
        %638 = vmatpush1.bf16.msra.mxu0 0
        %639 = vmatprep.subr.bf16.mxu0 0
        %640 = vmatpush1.bf16.msra.mxu0 0
        %641 = vmatprep.subr.bf16.mxu0 0
        %642 = vmatpush1.bf16.msra.mxu0 0
        %643 = vmatprep.subr.bf16.mxu0 0
        %644 = vmatpush1.bf16.msra.mxu0 0
        %645 = vmatprep.mubr.bf16.mxu0 0
        %646 = vmatmul.mubr.bf16.gmra.mrb[0].mxu0 %v611
        %v647 = vpop.f32.mrb[0].mxu0
        %v648 = vadd.f32 %v584, %v647
        %v649 = vpop.f32.mrb[0].mxu0
        %v650 = vpop.f32.mrb[0].mxu0
        %v651 = vadd.f32 %v584, %v650
        %v652 = vpop.f32.mrb[0].mxu0
        %653 = vdwg.mxu0
        %v654 = vmax.f32 %v648, 0.0
        %v655 = vmax.f32 %v651, 0.0
        %v656 = vpack.c.bf16 %v655, %v654
        %v657 = vld [vmem:[%s5] sm:$0xf]
        %v658 = vld [vmem:[%s5 + $0x4] sm:$0xf]
        %v659 = vld [vmem:[%s5 + $0x8] sm:$0xf]
        %v660 = vld [vmem:[%s5 + $0xc] sm:$0xf]
        %v661 = vld [vmem:[%s6] sm:$0x1]
        %v662 = vunpack.c.l.bf16 %v661
        %v663 = vlaneseq
        %v664 = vshrl.u32 %v663, 7
        %v665 = vsub.s32 0, %v664
        %v666 = vrot.slane %v662, %v665
        %v671 = vunpack.c.l.b16 %v657
        %v672 = vunpack.c.l.b16 %v658
        %v673 = vunpack.c.l.b16 %v659
        %v674 = vunpack.c.l.b16 %v660
        %v675 = vpack.c.b16 %v672, %v671
        %v676 = vpack.c.b16 %v674, %v673
        %vm679 = vcmask 261120
        %v681 = vsel %vm679, %v656, 0
        %683 = vmatprep.subr.bf16.mxu0 0
        %684 = vmatpush1.bf16.msra.mxu0 %v675
        %685 = vmatprep.subr.bf16.mxu0 0
        %686 = vmatpush1.bf16.msra.mxu0 %v676
        %687 = vmatprep.subr.bf16.mxu0 0
        %688 = vmatpush1.bf16.msra.mxu0 0
        %689 = vmatprep.subr.bf16.mxu0 0
        %690 = vmatpush1.bf16.msra.mxu0 0
        %691 = vmatprep.subr.bf16.mxu0 0
        %692 = vmatpush1.bf16.msra.mxu0 0
        %693 = vmatprep.subr.bf16.mxu0 0
        %694 = vmatpush1.bf16.msra.mxu0 0
        %695 = vmatprep.subr.bf16.mxu0 0
        %696 = vmatpush1.bf16.msra.mxu0 0
        %697 = vmatprep.subr.bf16.mxu0 0
        %698 = vmatpush1.bf16.msra.mxu0 0
        %699 = vmatprep.subr.bf16.mxu0 0
        %700 = vmatpush1.bf16.msra.mxu0 0
        %701 = vmatprep.subr.bf16.mxu0 0
        %702 = vmatpush1.bf16.msra.mxu0 0
        %703 = vmatprep.subr.bf16.mxu0 0
        %704 = vmatpush1.bf16.msra.mxu0 0
        %705 = vmatprep.subr.bf16.mxu0 0
        %706 = vmatpush1.bf16.msra.mxu0 0
        %707 = vmatprep.subr.bf16.mxu0 0
        %708 = vmatpush1.bf16.msra.mxu0 0
        %709 = vmatprep.subr.bf16.mxu0 0
        %710 = vmatpush1.bf16.msra.mxu0 0
        %711 = vmatprep.subr.bf16.mxu0 0
        %712 = vmatpush1.bf16.msra.mxu0 0
        %713 = vmatprep.subr.bf16.mxu0 0
        %714 = vmatpush1.bf16.msra.mxu0 0
        %715 = vmatprep.mubr.bf16.mxu0 0
        %716 = vmatmul.mubr.bf16.gmra.mrb[0].mxu0 %v681
        %v717 = vpop.f32.mrb[0].mxu0
        %v718 = vadd.f32 %v666, %v717
        %v719 = vpop.f32.mrb[0].mxu0
        %v720 = vpop.f32.mrb[0].mxu0
        %v721 = vadd.f32 %v666, %v720
        %v722 = vpop.f32.mrb[0].mxu0
        %723 = vdwg.mxu0
        %v724 = vmax.f32 %v718, 0.0
        %v725 = vmax.f32 %v721, 0.0
        %v726 = vpack.c.bf16 %v725, %v724
        %v727 = vld [vmem:[%s7] sm:$0xf]
        %v728 = vld [vmem:[%s7 + $0x4] sm:$0xf]
        %v729 = vld [vmem:[%s8] sm:$0x1]
        %v730 = vunpack.c.l.bf16 %v729
        %v731 = vlaneseq
        %v732 = vshrl.u32 %v731, 7
        %v733 = vsub.s32 0, %v732
        %v734 = vrot.slane %v730, %v733
        %v737 = vunpack.c.l.b16 %v727
        %v738 = vunpack.c.l.b16 %v728
        %v739 = vpack.c.b16 %v738, %v737
        %vm741 = vcmask 130048
        %v743 = vsel %vm741, %v726, 0
        %745 = vmatprep.subr.bf16.mxu0 0
        %746 = vmatpush1.bf16.msra.mxu0 %v739
        %747 = vmatprep.subr.bf16.mxu0 0
        %748 = vmatpush1.bf16.msra.mxu0 0
        %749 = vmatprep.subr.bf16.mxu0 0
        %750 = vmatpush1.bf16.msra.mxu0 0
        %751 = vmatprep.subr.bf16.mxu0 0
        %752 = vmatpush1.bf16.msra.mxu0 0
        %753 = vmatprep.subr.bf16.mxu0 0
        %754 = vmatpush1.bf16.msra.mxu0 0
        %755 = vmatprep.subr.bf16.mxu0 0
        %756 = vmatpush1.bf16.msra.mxu0 0
        %757 = vmatprep.subr.bf16.mxu0 0
        %758 = vmatpush1.bf16.msra.mxu0 0
        %759 = vmatprep.subr.bf16.mxu0 0
        %760 = vmatpush1.bf16.msra.mxu0 0
        %761 = vmatprep.subr.bf16.mxu0 0
        %762 = vmatpush1.bf16.msra.mxu0 0
        %763 = vmatprep.subr.bf16.mxu0 0
        %764 = vmatpush1.bf16.msra.mxu0 0
        %765 = vmatprep.subr.bf16.mxu0 0
        %766 = vmatpush1.bf16.msra.mxu0 0
        %767 = vmatprep.subr.bf16.mxu0 0
        %768 = vmatpush1.bf16.msra.mxu0 0
        %769 = vmatprep.subr.bf16.mxu0 0
        %770 = vmatpush1.bf16.msra.mxu0 0
        %771 = vmatprep.subr.bf16.mxu0 0
        %772 = vmatpush1.bf16.msra.mxu0 0
        %773 = vmatprep.subr.bf16.mxu0 0
        %774 = vmatpush1.bf16.msra.mxu0 0
        %775 = vmatprep.subr.bf16.mxu0 0
        %776 = vmatpush1.bf16.msra.mxu0 0
        %777 = vmatprep.mubr.bf16.mxu0 0
        %778 = vmatmul.mubr.bf16.gmra.mrb[0].mxu0 %v743
        %v779 = vpop.f32.mrb[0].mxu0
        %v780 = vadd.f32 %v734, %v779
        %v781 = vpop.f32.mrb[0].mxu0
        %v782 = vpop.f32.mrb[0].mxu0
        %v783 = vadd.f32 %v734, %v782
        %v784 = vpop.f32.mrb[0].mxu0
        %785 = vdwg.mxu0
        %v786 = vmax.f32 %v780, 0.0
        %v787 = vmax.f32 %v783, 0.0
        %v788 = vpack.c.bf16 %v787, %v786
        %v789 = vld [vmem:[%s9] sm:$0xf]
        %v790 = vld [vmem:[%s9 + $0x4] sm:$0xf]
        %v791 = vld [vmem:[%s9 + $0x8] sm:$0xf]
        %v792 = vld [vmem:[%s9 + $0xc] sm:$0xf]
        %v793 = vld [vmem:[%s10] sm:$0x1]
        %v794 = vunpack.c.l.bf16 %v793
        %v795 = vlaneseq
        %v796 = vshrl.u32 %v795, 7
        %v797 = vsub.s32 0, %v796
        %v798 = vrot.slane %v794, %v797
        %v803 = vunpack.c.l.b16 %v789
        %v804 = vunpack.c.l.b16 %v790
        %v805 = vunpack.c.l.b16 %v791
        %v806 = vunpack.c.l.b16 %v792
        %v807 = vpack.c.b16 %v804, %v803
        %v808 = vpack.c.b16 %v806, %v805
        %v812 = vsel %vm679, %v788, 0
        %814 = vmatprep.subr.bf16.mxu0 0
        %815 = vmatpush1.bf16.msra.mxu0 %v807
        %816 = vmatprep.subr.bf16.mxu0 0
        %817 = vmatpush1.bf16.msra.mxu0 %v808
        %818 = vmatprep.subr.bf16.mxu0 0
        %819 = vmatpush1.bf16.msra.mxu0 0
        %820 = vmatprep.subr.bf16.mxu0 0
        %821 = vmatpush1.bf16.msra.mxu0 0
        %822 = vmatprep.subr.bf16.mxu0 0
        %823 = vmatpush1.bf16.msra.mxu0 0
        %824 = vmatprep.subr.bf16.mxu0 0
        %825 = vmatpush1.bf16.msra.mxu0 0
        %826 = vmatprep.subr.bf16.mxu0 0
        %827 = vmatpush1.bf16.msra.mxu0 0
        %828 = vmatprep.subr.bf16.mxu0 0
        %829 = vmatpush1.bf16.msra.mxu0 0
        %830 = vmatprep.subr.bf16.mxu0 0
        %831 = vmatpush1.bf16.msra.mxu0 0
        %832 = vmatprep.subr.bf16.mxu0 0
        %833 = vmatpush1.bf16.msra.mxu0 0
        %834 = vmatprep.subr.bf16.mxu0 0
        %835 = vmatpush1.bf16.msra.mxu0 0
        %836 = vmatprep.subr.bf16.mxu0 0
        %837 = vmatpush1.bf16.msra.mxu0 0
        %838 = vmatprep.subr.bf16.mxu0 0
        %839 = vmatpush1.bf16.msra.mxu0 0
        %840 = vmatprep.subr.bf16.mxu0 0
        %841 = vmatpush1.bf16.msra.mxu0 0
        %842 = vmatprep.subr.bf16.mxu0 0
        %843 = vmatpush1.bf16.msra.mxu0 0
        %844 = vmatprep.subr.bf16.mxu0 0
        %845 = vmatpush1.bf16.msra.mxu0 0
        %846 = vmatprep.mubr.bf16.mxu0 0
        %847 = vmatmul.mubr.bf16.gmra.mrb[0].mxu0 %v812
        %v848 = vpop.f32.mrb[0].mxu0
        %v849 = vadd.f32 %v798, %v848
        %v850 = vpop.f32.mrb[0].mxu0
        %v851 = vpop.f32.mrb[0].mxu0
        %v852 = vadd.f32 %v798, %v851
        %v853 = vpop.f32.mrb[0].mxu0
        %854 = vdwg.mxu0
        %v855 = vmax.f32 %v849, 0.0
        %v856 = vmax.f32 %v852, 0.0
        %v857 = vpack.c.bf16 %v856, %v855
        %v858 = vld [vmem:[%s11] sm:$0xf]
        %v859 = vld [vmem:[%s11 + $0x4] sm:$0xf]
        %v860 = vld [vmem:[%s11 + $0x8] sm:$0xf]
        %v861 = vld [vmem:[%s11 + $0xc] sm:$0xf]
        %v862 = vld [vmem:[%s11 + $0x10] sm:$0xf]
        %v863 = vld [vmem:[%s11 + $0x14] sm:$0xf]
        %v864 = vld [vmem:[%s11 + $0x18] sm:$0xf]
        %v865 = vld [vmem:[%s11 + $0x1c] sm:$0xf]
        %v866 = vld [vmem:[%s12] sm:$0x1]
        %v867 = vunpack.c.l.bf16 %v866
        %v868 = vlaneseq
        %v869 = vshrl.u32 %v868, 7
        %v870 = vsub.s32 0, %v869
        %v871 = vrot.slane %v867, %v870
        %v880 = vunpack.c.l.b16 %v858
        %v881 = vunpack.c.l.b16 %v859
        %v882 = vunpack.c.l.b16 %v860
        %v883 = vunpack.c.l.b16 %v861
        %v884 = vunpack.c.l.b16 %v862
        %v885 = vunpack.c.l.b16 %v863
        %v886 = vunpack.c.l.b16 %v864
        %v887 = vunpack.c.l.b16 %v865
        %v888 = vpack.c.b16 %v881, %v880
        %v889 = vpack.c.b16 %v883, %v882
        %v890 = vpack.c.b16 %v885, %v884
        %v891 = vpack.c.b16 %v887, %v886
        %v897 = vsel %vm609, %v857, 0
        %899 = vmatprep.subr.bf16.mxu0 0
        %900 = vmatpush1.bf16.msra.mxu0 %v888
        %901 = vmatprep.subr.bf16.mxu0 0
        %902 = vmatpush1.bf16.msra.mxu0 %v889
        %903 = vmatprep.subr.bf16.mxu0 0
        %904 = vmatpush1.bf16.msra.mxu0 %v890
        %905 = vmatprep.subr.bf16.mxu0 0
        %906 = vmatpush1.bf16.msra.mxu0 %v891
        %907 = vmatprep.subr.bf16.mxu0 0
        %908 = vmatpush1.bf16.msra.mxu0 0
        %909 = vmatprep.subr.bf16.mxu0 0
        %910 = vmatpush1.bf16.msra.mxu0 0
        %911 = vmatprep.subr.bf16.mxu0 0
        %912 = vmatpush1.bf16.msra.mxu0 0
        %913 = vmatprep.subr.bf16.mxu0 0
        %914 = vmatpush1.bf16.msra.mxu0 0
        %915 = vmatprep.subr.bf16.mxu0 0
        %916 = vmatpush1.bf16.msra.mxu0 0
        %917 = vmatprep.subr.bf16.mxu0 0
        %918 = vmatpush1.bf16.msra.mxu0 0
        %919 = vmatprep.subr.bf16.mxu0 0
        %920 = vmatpush1.bf16.msra.mxu0 0
        %921 = vmatprep.subr.bf16.mxu0 0
        %922 = vmatpush1.bf16.msra.mxu0 0
        %923 = vmatprep.subr.bf16.mxu0 0
        %924 = vmatpush1.bf16.msra.mxu0 0
        %925 = vmatprep.subr.bf16.mxu0 0
        %926 = vmatpush1.bf16.msra.mxu0 0
        %927 = vmatprep.subr.bf16.mxu0 0
        %928 = vmatpush1.bf16.msra.mxu0 0
        %929 = vmatprep.subr.bf16.mxu0 0
        %930 = vmatpush1.bf16.msra.mxu0 0
        %931 = vmatprep.mubr.bf16.mxu0 0
        %932 = vmatmul.mubr.bf16.gmra.mrb[0].mxu0 %v897
        %v933 = vpop.f32.mrb[0].mxu0
        %v934 = vadd.f32 %v871, %v933
        %v935 = vpop.f32.mrb[0].mxu0
        %v936 = vpop.f32.mrb[0].mxu0
        %v937 = vadd.f32 %v871, %v936
        %v938 = vpop.f32.mrb[0].mxu0
        %939 = vdwg.mxu0
        %v940 = vmax.f32 %v934, -30.0
        %v941 = vmax.f32 %v937, -30.0
        %v942 = vmin.f32 %v940, 30.0
        %v943 = vmin.f32 %v941, 30.0
        %v944 = vsub.f32 0.0, %v942
        %v945 = vsub.f32 0.0, %v943
        %v946 = vmul.f32 %v944, 1.442695
        %v947 = vpow.pop %v946
        %v948 = vmul.f32 %v945, 1.442695
        %v949 = vpow.pop %v948
        %v950 = vadd.f32 %v947, 1.0
        %v951 = vadd.f32 %v949, 1.0
        %v952 = vrcp.pop %v950
        %v953 = vrcp.pop %v951
        %v954 = vpack.c.bf16 %v953, %v952
        %v956 = vunpack.c.l.b16 %v954
        %v957 = vunpack.c.h.b16 %v954
        %v958 = vpack.c.b16 %v956, %v956
        %v959 = vpack.c.b16 %v957, %v957
        %vm962 = vcmask 936960
        %963 = vst.msk [vmem:[%s434] sm:$0xf] %vm962, %v958
        %964 = vst.msk [vmem:[%s434 + $0x4] sm:$0xf] %vm962, %v959
        %s965 = sand.u32 %s313, 1
        %s966 = scalar_lea.sflag [#allocation3], %s965
        %s967 = sand.u32 %s313, 1
        %s968 = smul.addr %s967, 8
        %s969 = scalar_lea.vmem [#allocation2], %s968
        // Predicated region
        $region73: #{tpu_custom_call.1} parent=71 // pred_check
          %p970 = pneg %p323
        $region74: #{tpu_custom_call.1} parent=71 // pred_check_branch
          %972 = sbr.rel (%p970) target = $region76
        $region75: #{tpu_custom_call.1} parent=71 // pred_region
          %s973 = smul.u32 2, %s27
          %s975 = ssub.s32 128, 128
          %976 = vsyncadd %s966, %s975
          %s977 = smul.addr %s973, 64
          %s978 = scalar_lea.hbm %s13, %s977
          %s979 = sshll.u32 %s969, 4
          %s980 = int_to_ptr.vmem [resolvable:$true] %s979
          %985 = dma.vmem_to_hbm [thread:$0]  %s980, 128, %s978, %s966, 64, 64, 4
        $region76: #{tpu_custom_call.1} parent=71 // pred_fallthru
          _
      $region72: #{tpu_custom_call.1} parent=5 // pred_fallthru
        _
      %p986 = scmp.le.s32.totalorder 2, %s22
      // Predicated region
      $region77: #{tpu_custom_call.1} parent=5 // pred_check
        %p987 = pneg %p986
      $region78: #{tpu_custom_call.1} parent=5 // pred_check_branch
        %989 = sbr.rel (%p987) target = $region80
      $region79: #{tpu_custom_call.1} parent=5 // pred_region
        %s990 = ssub.s32 %s22, 2
        // Predicated region
        $region81: #{tpu_custom_call.1} parent=79 // pred_check
          %p991 = pneg %p329
        $region82: #{tpu_custom_call.1} parent=79 // pred_check_branch
          %993 = sbr.rel (%p991) target = $region84
        $region83: #{tpu_custom_call.1} parent=79 // pred_region
          %s994 = sand.u32 %s314, 1
          %s995 = scalar_lea.sflag [#allocation3], %s994
          %s996 = sand.u32 %s314, 1
          %s997 = smul.addr %s996, 8
          %s998 = scalar_lea.vmem [#allocation2], %s997
          %999 = dma.done %s995, 128
        $region84: #{tpu_custom_call.1} parent=79 // pred_fallthru
          _
      $region80: #{tpu_custom_call.1} parent=5 // pred_fallthru
        _
    $region6: #{tpu_custom_call.1} parent=1 // loop_footer
      %s26 = sadd.s32 1, %s22
    $region7: #{tpu_custom_call.1} parent=1 // loop_footer_branch
      %21 = sbr.rel target = $region3
    $region8: #{tpu_custom_call.1} parent=1 // loop_exit
      _
    %1000 = vsyncpa [#allocation3], 1
    %s1001 = scalar_lea.sflag [#allocation3], 1
    %1002 = vsyncpa %s1001, 1

</llo_original>
